<compile_context>
chip_gen: v5e
topology: v5e:2x2
jax: 0.10.0
libtpu: 0.0.40
codegen_flags: <defaults>
</compile_context>

<pallas_src>
import functools

import jax
import jax.numpy as jnp
from jax import lax
from jax.experimental import pallas as pl
from jax.experimental.pallas import tpu as pltpu

NEG_SLOPE = 0.01  # torch.nn.LeakyReLU default negative_slope
_MIB = 1024 * 1024


def _round_up(n, m):
    return ((n + m - 1) // m) * m


def _leaky_relu(x):
    return jnp.where(x > 0, x, NEG_SLOPE * x)


def discriminator_kernel(x_ref,
                         w1_ref, b1_ref,
                         w2_ref, b2_ref,
                         w3_ref, b3_ref,
                         w4t_ref, b4_ref,
                         o_ref):
    """One batch tile of the full MLP; output written lane-dense as (1, tile)."""

    def dense(h, w_ref, b_ref):
        y = jnp.dot(h.astype(w_ref.dtype), w_ref[...],
                    preferred_element_type=jnp.float32)
        return y + b_ref[...]  # bias kept in f32

    h = _leaky_relu(dense(x_ref[...], w1_ref, b1_ref))   # (tile, 64)  f32
    h = _leaky_relu(dense(h, w2_ref, b2_ref))            # (tile, 32)  f32
    h = _leaky_relu(dense(h, w3_ref, b3_ref))            # (tile, 16)  f32

    # Final layer computed directly in lane-dense orientation (no transpose):
    #   logits[0, m] = sum_k w4t[0, k] * h[m, k]   ->  shape (1, tile)
    logits = lax.dot_general(
        w4t_ref[...], h.astype(w4t_ref.dtype),
        dimension_numbers=(((1,), (1,)), ((), ())),
        preferred_element_type=jnp.float32) + b4_ref[...]            # (1, tile)

    # Exact sigmoid via one EUP tanh (no approx reciprocal, no VALU divide).
    o_ref[...] = (0.5 + 0.5 * jnp.tanh(0.5 * logits)).astype(o_ref.dtype)


def _vmem_budgets():
    """Return (x-tile budget bytes, scoped vmem_limit_bytes) per TPU generation."""
    try:
        cap = pltpu.get_tpu_info().vmem_capacity_bytes
    except Exception:
        cap = 64 * _MIB  # conservative (v7x-sized) fallback, e.g. interpret mode
    if cap >= 128 * _MIB:           # v5e / v6e: 128 MiB physical VMEM
        return 48 * _MIB, 96 * _MIB
    return 24 * _MIB, 48 * _MIB     # v7x: 64 MiB per TensorCore


def discriminator_forward(x, params, *, batch_tile=1024,
                          stream_dtype=jnp.bfloat16):
    """x: (B, D); params: [(w, b)]*4 with w as (in, out). Returns (B, 1) f32.

    batch_tile: target batch tile (clamped by VMEM budget and B; multiples of
                128 are used whenever the grid has more than one step).
    stream_dtype: dtype used to stream x and the weights through HBM
                  (bf16 default; biases and all accumulation stay f32).
                  Pass None for the exact f32 path.
    """
    (w1, b1), (w2, b2), (w3, b3), (w4, b4) = params
    B, D = x.shape

    if stream_dtype is not None:
        x = x.astype(stream_dtype)
        w1, w2, w3, w4 = (w.astype(stream_dtype) for w in (w1, w2, w3, w4))

    # Pre-transpose the final (16, 1) weight to (1, 16) so the kernel emits a
    # lane-dense (1, tile) output without an in-kernel transpose.
    w4t = jnp.transpose(w4)

    itemsize = jnp.dtype(x.dtype).itemsize
    x_budget_base, vmem_limit = _vmem_budgets()

    # Resident operand footprint. Constant-index blocks are still allocated
    # double-buffered by the pipeliner, so count them twice and take that out
    # of the x budget (matters for large D on v7x's 64 MiB VMEM).
    wt_bytes = 2 * ((D * 64 + 64 * 32 + 32 * 16 + 16 * 1) * itemsize
                    + (64 + 32 + 16 + 1) * 4)
    x_budget = max(2 * _MIB, x_budget_base - wt_bytes)

    # Largest batch tile whose double-buffered x slab fits the budget.
    row_bytes = D * itemsize
    fit = x_budget // (2 * row_bytes)
    tile = int(min(batch_tile, max(fit, 128), _round_up(B, 8)))
    if tile > 128:
        tile = (tile // 128) * 128            # MXU-M fill + lane-dense output
        while tile > 128 and pl.cdiv(B, tile) < 4:
            tile -= 128                       # >= 2 grid steps per v7x TC
    elif tile < B:
        tile = 128                            # multi-tile grid needs tile % 128 == 0
    tile = _round_up(tile, 8)

    # Pad batch so the grid covers it exactly (padded rows sliced off below).
    Bp = _round_up(B, tile)
    if Bp != B:
        x = jnp.pad(x, ((0, Bp - B), (0, 0)))
    num_tiles = Bp // tile

    full = lambda a: pl.BlockSpec(a.shape, lambda i: (0, 0))  # untiled operand

    out = pl.pallas_call(
        discriminator_kernel,
        out_shape=jax.ShapeDtypeStruct((1, Bp), jnp.float32),
        grid_spec=pltpu.PrefetchScalarGridSpec(
            num_scalar_prefetch=0,
            grid=(num_tiles,),
            in_specs=[
                pl.BlockSpec((tile, D), lambda i: (i, 0)),  # x batch tile
                full(w1), full(b1),
                full(w2), full(b2),
                full(w3), full(b3),
                full(w4t), full(b4),
            ],
            # Lane-dense output: (1, tile) lanes of a single row per grid step.
            out_specs=pl.BlockSpec((1, tile), lambda i: (0, i)),
        ),
        compiler_params=pltpu.CompilerParams(
            dimension_semantics=("parallel",),
            vmem_limit_bytes=vmem_limit),
    )(x, w1, b1, w2, b2, w3, b3, w4t, b4)

    # (1, Bp) -> (Bp, 1) -> drop padding -> (B, 1)
    return out.reshape(Bp, 1)[:B]


def init_params(key, input_size):
    """Deterministic init, PyTorch-Linear-style uniform(-1/sqrt(fan_in), +)."""
    dims = [input_size, 64, 32, 16, 1]
    params = []
    for li, (fan_in, fan_out) in enumerate(zip(dims[:-1], dims[1:])):
        kw, kb = jax.random.split(jax.random.fold_in(key, li))
        bound = 1.0 / jnp.sqrt(float(fan_in))
        # stored as (in, out) => y = x @ W + b
        w = jax.random.uniform(kw, (fan_in, fan_out), jnp.float32, -bound, bound)
        b = jax.random.uniform(kb, (1, fan_out), jnp.float32, -bound, bound)
        params.append((w, b))
    return params


def reference_forward(x, params):
    dot = functools.partial(jnp.dot, precision=lax.Precision.HIGHEST)
    (w1, b1), (w2, b2), (w3, b3), (w4, b4) = params
    h = jax.nn.leaky_relu(dot(x, w1) + b1, NEG_SLOPE)
    h = jax.nn.leaky_relu(dot(h, w2) + b2, NEG_SLOPE)
    h = jax.nn.leaky_relu(dot(h, w3) + b3, NEG_SLOPE)
    return jax.nn.sigmoid(dot(h, w4) + b4)


if __name__ == "__main__":
    # Small, module-consistent shapes: Discriminator(input_size=256).
    # BATCH=512 -> the tile heuristic picks tile=128 / 4 grid steps, so both
    # v7x TensorCores get >= 2 pipelined steps each.
    INPUT_SIZE = 256
    BATCH = 512

    key = jax.random.PRNGKey(0)
    kx, kp = jax.random.split(key)

    x = jax.random.normal(kx, (BATCH, INPUT_SIZE), jnp.float32)
    params = init_params(kp, INPUT_SIZE)
    ref = reference_forward(x, params)

    # 1) Exact f32 streaming path. The approx-reciprocal error of the previous
    #    version is gone; the remaining tolerance only covers MXU-vs-XLA matmul
    #    precision differences on hardware (it is ~1e-7 in interpret mode).
    out_f32 = jax.block_until_ready(
        discriminator_forward(x, params, stream_dtype=None))
    assert out_f32.shape == (BATCH, 1), out_f32.shape
    err_f32 = float(jnp.max(jnp.abs(out_f32 - ref)))
    assert err_f32 < 2e-3, f"f32 path max abs err {err_f32}"

    # 2) Default bf16-streaming path (x/weights bf16, f32 bias + accumulation).
    #    Tolerance sized for bf16 quantization of the streamed operands.
    out_bf16 = jax.block_until_ready(discriminator_forward(x, params))
    assert out_bf16.shape == (BATCH, 1), out_bf16.shape
    err_bf16 = float(jnp.max(jnp.abs(out_bf16 - ref)))
    assert err_bf16 < 2e-2, f"bf16 path max abs err {err_bf16}"

    # 3) Ragged-batch path (padding + single-tile clamp) sanity check.
    x_small = x[:37]
    out_small = jax.block_until_ready(discriminator_forward(x_small, params))
    ref_small = reference_forward(x_small, params)
    assert out_small.shape == (37, 1), out_small.shape
    err_small = float(jnp.max(jnp.abs(out_small - ref_small)))
    assert err_small < 2e-2, f"ragged bf16 path max abs err {err_small}"

    print("KERNEL_OK")
</pallas_src>

<mosaic_0001>
module attributes {stable_mosaic.version = 11 : i64} {
  func.func @discriminator_kernel(%arg0: i32, %arg1: memref<128x256xf32, #tpu.memory_space<vmem>>, %arg2: memref<256x64xf32, #tpu.memory_space<vmem>>, %arg3: memref<1x64xf32, #tpu.memory_space<vmem>>, %arg4: memref<64x32xf32, #tpu.memory_space<vmem>>, %arg5: memref<1x32xf32, #tpu.memory_space<vmem>>, %arg6: memref<32x16xf32, #tpu.memory_space<vmem>>, %arg7: memref<1x16xf32, #tpu.memory_space<vmem>>, %arg8: memref<1x16xf32, #tpu.memory_space<vmem>>, %arg9: memref<1x1xf32, #tpu.memory_space<vmem>>, %arg10: memref<1x128xf32, #tpu.memory_space<vmem>>) attributes {dimension_semantics = [#tpu.dimension_semantics<parallel>], iteration_bounds = array<i64: 4>, scalar_prefetch = 0 : i64, scratch_operands = 0 : i64, tpu.core_type = #tpu.core_type<tc>, window_params = [{transform_indices = @transform_0, window_bounds = array<i64: 128, 256>}, {pipeline_mode = #tpu.pipeline_mode<synchronous>, transform_indices = @transform_1, window_bounds = array<i64: 256, 64>}, {pipeline_mode = #tpu.pipeline_mode<synchronous>, transform_indices = @transform_2, window_bounds = array<i64: 1, 64>}, {pipeline_mode = #tpu.pipeline_mode<synchronous>, transform_indices = @transform_3, window_bounds = array<i64: 64, 32>}, {pipeline_mode = #tpu.pipeline_mode<synchronous>, transform_indices = @transform_4, window_bounds = array<i64: 1, 32>}, {pipeline_mode = #tpu.pipeline_mode<synchronous>, transform_indices = @transform_5, window_bounds = array<i64: 32, 16>}, {pipeline_mode = #tpu.pipeline_mode<synchronous>, transform_indices = @transform_6, window_bounds = array<i64: 1, 16>}, {pipeline_mode = #tpu.pipeline_mode<synchronous>, transform_indices = @transform_7, window_bounds = array<i64: 1, 16>}, {pipeline_mode = #tpu.pipeline_mode<synchronous>, transform_indices = @transform_8, window_bounds = array<i64: 1, 1>}, {transform_indices = @transform_9, window_bounds = array<i64: 1, 128>}]} {
    %c0 = arith.constant 0 : index
    %c0_0 = arith.constant 0 : index
    %0 = vector.load %arg1[%c0, %c0_0] : memref<128x256xf32, #tpu.memory_space<vmem>>, vector<128x256xf32>
    %c0_1 = arith.constant 0 : index
    %c0_2 = arith.constant 0 : index
    %1 = vector.load %arg2[%c0_1, %c0_2] : memref<256x64xf32, #tpu.memory_space<vmem>>, vector<256x64xf32>
    %cst = arith.constant dense<0.000000e+00> : vector<128x64xf32>
    %2 = tpu.matmul %0, %1, %cst {dimension_numbers = #tpu.dot_dimension_numbers<[1], [0], [0], [1], [0, 0, 1, 1], [], []>} : vector<128x256xf32>, vector<256x64xf32>, vector<128x64xf32> -> vector<128x64xf32>
    %c0_3 = arith.constant 0 : index
    %c0_4 = arith.constant 0 : index
    %3 = vector.load %arg3[%c0_3, %c0_4] : memref<1x64xf32, #tpu.memory_space<vmem>>, vector<1x64xf32>
    %4 = vector.broadcast %3 : vector<1x64xf32> to vector<128x64xf32>
    %5 = arith.addf %2, %4 : vector<128x64xf32>
    %cst_5 = arith.constant 0.000000e+00 : f32
    %6 = vector.broadcast %cst_5 : f32 to vector<128x64xf32>
    %7 = arith.cmpf ogt, %5, %6 : vector<128x64xf32>
    %cst_6 = arith.constant 0.00999999977 : f32
    %8 = vector.broadcast %cst_6 : f32 to vector<128x64xf32>
    %9 = arith.mulf %8, %5 : vector<128x64xf32>
    %10 = arith.select %7, %5, %9 : vector<128x64xi1>, vector<128x64xf32>
    %c0_7 = arith.constant 0 : index
    %c0_8 = arith.constant 0 : index
    %11 = vector.load %arg4[%c0_7, %c0_8] : memref<64x32xf32, #tpu.memory_space<vmem>>, vector<64x32xf32>
    %cst_9 = arith.constant dense<0.000000e+00> : vector<128x32xf32>
    %12 = tpu.matmul %10, %11, %cst_9 {dimension_numbers = #tpu.dot_dimension_numbers<[1], [0], [0], [1], [0, 0, 1, 1], [], []>} : vector<128x64xf32>, vector<64x32xf32>, vector<128x32xf32> -> vector<128x32xf32>
    %c0_10 = arith.constant 0 : index
    %c0_11 = arith.constant 0 : index
    %13 = vector.load %arg5[%c0_10, %c0_11] : memref<1x32xf32, #tpu.memory_space<vmem>>, vector<1x32xf32>
    %14 = vector.broadcast %13 : vector<1x32xf32> to vector<128x32xf32>
    %15 = arith.addf %12, %14 : vector<128x32xf32>
    %cst_12 = arith.constant 0.000000e+00 : f32
    %16 = vector.broadcast %cst_12 : f32 to vector<128x32xf32>
    %17 = arith.cmpf ogt, %15, %16 : vector<128x32xf32>
    %cst_13 = arith.constant 0.00999999977 : f32
    %18 = vector.broadcast %cst_13 : f32 to vector<128x32xf32>
    %19 = arith.mulf %18, %15 : vector<128x32xf32>
    %20 = arith.select %17, %15, %19 : vector<128x32xi1>, vector<128x32xf32>
    %c0_14 = arith.constant 0 : index
    %c0_15 = arith.constant 0 : index
    %21 = vector.load %arg6[%c0_14, %c0_15] : memref<32x16xf32, #tpu.memory_space<vmem>>, vector<32x16xf32>
    %cst_16 = arith.constant dense<0.000000e+00> : vector<128x16xf32>
    %22 = tpu.matmul %20, %21, %cst_16 {dimension_numbers = #tpu.dot_dimension_numbers<[1], [0], [0], [1], [0, 0, 1, 1], [], []>} : vector<128x32xf32>, vector<32x16xf32>, vector<128x16xf32> -> vector<128x16xf32>
    %c0_17 = arith.constant 0 : index
    %c0_18 = arith.constant 0 : index
    %23 = vector.load %arg7[%c0_17, %c0_18] : memref<1x16xf32, #tpu.memory_space<vmem>>, vector<1x16xf32>
    %24 = vector.broadcast %23 : vector<1x16xf32> to vector<128x16xf32>
    %25 = arith.addf %22, %24 : vector<128x16xf32>
    %cst_19 = arith.constant 0.000000e+00 : f32
    %26 = vector.broadcast %cst_19 : f32 to vector<128x16xf32>
    %27 = arith.cmpf ogt, %25, %26 : vector<128x16xf32>
    %cst_20 = arith.constant 0.00999999977 : f32
    %28 = vector.broadcast %cst_20 : f32 to vector<128x16xf32>
    %29 = arith.mulf %28, %25 : vector<128x16xf32>
    %30 = arith.select %27, %25, %29 : vector<128x16xi1>, vector<128x16xf32>
    %c0_21 = arith.constant 0 : index
    %c0_22 = arith.constant 0 : index
    %31 = vector.load %arg8[%c0_21, %c0_22] : memref<1x16xf32, #tpu.memory_space<vmem>>, vector<1x16xf32>
    %cst_23 = arith.constant dense<0.000000e+00> : vector<1x128xf32>
    %32 = tpu.matmul %31, %30, %cst_23 {dimension_numbers = #tpu.dot_dimension_numbers<[1], [1], [0], [0], [0, 0, 1, 0], [], []>} : vector<1x16xf32>, vector<128x16xf32>, vector<1x128xf32> -> vector<1x128xf32>
    %c0_24 = arith.constant 0 : index
    %c0_25 = arith.constant 0 : index
    %33 = vector.load %arg9[%c0_24, %c0_25] : memref<1x1xf32, #tpu.memory_space<vmem>>, vector<1x1xf32>
    %34 = vector.broadcast %33 : vector<1x1xf32> to vector<1x128xf32>
    %35 = arith.addf %32, %34 : vector<1x128xf32>
    %cst_26 = arith.constant 5.000000e-01 : f32
    %36 = vector.broadcast %cst_26 : f32 to vector<1x128xf32>
    %37 = arith.mulf %36, %35 : vector<1x128xf32>
    %38 = math.tanh %37 : vector<1x128xf32>
    %cst_27 = arith.constant 5.000000e-01 : f32
    %39 = vector.broadcast %cst_27 : f32 to vector<1x128xf32>
    %40 = arith.mulf %39, %38 : vector<1x128xf32>
    %cst_28 = arith.constant 5.000000e-01 : f32
    %41 = vector.broadcast %cst_28 : f32 to vector<1x128xf32>
    %42 = arith.addf %41, %40 : vector<1x128xf32>
    %c0_29 = arith.constant 0 : index
    %c0_30 = arith.constant 0 : index
    %43 = vector.load %arg10[%c0_29, %c0_30] : memref<1x128xf32, #tpu.memory_space<vmem>>, vector<1x128xf32>
    tpu.vector_store %arg10[%c0_29, %c0_30], %42 {strides = array<i32>} : memref<1x128xf32, #tpu.memory_space<vmem>>, vector<1x128xf32>,
    return
  }
  func.func @transform_0(%arg0: i32) -> (i32, i32) {
    %c0_i32 = arith.constant 0 : i32
    %c0_i32_0 = arith.constant 0 : i32
    return %arg0, %c0_i32 : i32, i32
  }
  func.func @transform_1(%arg0: i32) -> (i32, i32) {
    %c0_i32 = arith.constant 0 : i32
    %c0_i32_0 = arith.constant 0 : i32
    %c0_i32_1 = arith.constant 0 : i32
    return %c0_i32, %c0_i32_0 : i32, i32
  }
  func.func @transform_2(%arg0: i32) -> (i32, i32) {
    %c0_i32 = arith.constant 0 : i32
    %c0_i32_0 = arith.constant 0 : i32
    %c0_i32_1 = arith.constant 0 : i32
    return %c0_i32, %c0_i32_0 : i32, i32
  }
  func.func @transform_3(%arg0: i32) -> (i32, i32) {
    %c0_i32 = arith.constant 0 : i32
    %c0_i32_0 = arith.constant 0 : i32
    %c0_i32_1 = arith.constant 0 : i32
    return %c0_i32, %c0_i32_0 : i32, i32
  }
  func.func @transform_4(%arg0: i32) -> (i32, i32) {
    %c0_i32 = arith.constant 0 : i32
    %c0_i32_0 = arith.constant 0 : i32
    %c0_i32_1 = arith.constant 0 : i32
    return %c0_i32, %c0_i32_0 : i32, i32
  }
  func.func @transform_5(%arg0: i32) -> (i32, i32) {
    %c0_i32 = arith.constant 0 : i32
    %c0_i32_0 = arith.constant 0 : i32
    %c0_i32_1 = arith.constant 0 : i32
    return %c0_i32, %c0_i32_0 : i32, i32
  }
  func.func @transform_6(%arg0: i32) -> (i32, i32) {
    %c0_i32 = arith.constant 0 : i32
    %c0_i32_0 = arith.constant 0 : i32
    %c0_i32_1 = arith.constant 0 : i32
    return %c0_i32, %c0_i32_0 : i32, i32
  }
  func.func @transform_7(%arg0: i32) -> (i32, i32) {
    %c0_i32 = arith.constant 0 : i32
    %c0_i32_0 = arith.constant 0 : i32
    %c0_i32_1 = arith.constant 0 : i32
    return %c0_i32, %c0_i32_0 : i32, i32
  }
  func.func @transform_8(%arg0: i32) -> (i32, i32) {
    %c0_i32 = arith.constant 0 : i32
    %c0_i32_0 = arith.constant 0 : i32
    %c0_i32_1 = arith.constant 0 : i32
    return %c0_i32, %c0_i32_0 : i32, i32
  }
  func.func @transform_9(%arg0: i32) -> (i32, i32) {
    %c0_i32 = arith.constant 0 : i32
    %c0_i32_0 = arith.constant 0 : i32
    return %c0_i32, %arg0 : i32, i32
  }
}

</mosaic_0001>

<llo_original>
// kernel: tpu_custom_call.1
$region0: #{tpu_custom_call.1}
  #allocation0 [shape = 'u32[]', space=smem, size = 0x4, offset = 0x4, fixed_abs, tag = 'smem constant byte address 0x4 - core index']
  #allocation1 [shape = 'u32[72,128]{1,0:T(1,128)}', space=vmem, size = 0x9000, scoped, tag = 'internal scratch']
  #allocation2 [shape = 'f32[1,1]{1,0:T(1,128)S(1)}', space=vmem, size = 0x200, scoped, tag = 'scoped memory for tpu_custom_call.1']
  %s0 = inlined_call_operand.hbm [shape: f32[512,256], index: 0, kind: input, shape index: {}]
  %s1 = inlined_call_operand.vmem [shape: f32[256,64], index: 1, kind: input, shape index: {}]
  %s2 = inlined_call_operand.vmem [shape: f32[1,64], index: 2, kind: input, shape index: {}]
  %s3 = inlined_call_operand.vmem [shape: f32[64,32], index: 3, kind: input, shape index: {}]
  %s4 = inlined_call_operand.vmem [shape: f32[1,32], index: 4, kind: input, shape index: {}]
  %s5 = inlined_call_operand.vmem [shape: f32[32,16], index: 5, kind: input, shape index: {}]
  %s6 = inlined_call_operand.vmem [shape: f32[1,16], index: 6, kind: input, shape index: {}]
  %s7 = inlined_call_operand.vmem [shape: f32[1,16], index: 7, kind: input, shape index: {}]
  %s8 = inlined_call_operand.<no memory space> [shape: f32[1,1], index: 8, kind: input, shape index: {}]
  %s9 = inlined_call_operand.hbm [shape: f32[1,512], index: 9, kind: output, shape index: {}]
  %s10 = sld [smem:[#allocation0]]
  $region73: #{tpu_custom_call.1} parent=0
    _
  %s12 = ssub.s32 1, %s10
  %s13 = scalar_select 0, %s12, %s10
  %v14 = vstv %s8
  %15 = vst [vmem:[#allocation2] sm:$0x1] %v14
  $region1: #{tpu_custom_call.1} parent=0
    #allocation3 [shape = 'u8[262144]{0}', space=vmem, size = 0x40000, scoped, tag = 'input window, operand 0']
    #allocation4 [shape = 's32[2]{0}', space=sflag, size = 0x8, scoped, tag = 'scoped memory for tpu_custom_call.1']
    #allocation5 [shape = 's32[2]{0}', space=sflag, size = 0x8, scoped, tag = 'scoped memory for tpu_custom_call.1']
    #allocation6 [shape = 'u8[1024]{0}', space=vmem, size = 0x400, scoped, tag = 'output window, operand 0']
    %16 = vsyncpa [#allocation4], 0
    %s17 = scalar_lea.sflag [#allocation4], 1
    %18 = vsyncpa %s17, 0
    %19 = vsyncpa [#allocation5], 0
    %s20 = scalar_lea.sflag [#allocation5], 1
    %21 = vsyncpa %s20, 0
    loop: start=0, step=1, limit=6
    $region2: #{tpu_custom_call.1} parent=1 // loop_pre_header
      _
    $region3: #{tpu_custom_call.1} parent=1 // loop_header
      %s23 = sphi 0, %s27
      %p24 = scmp.ge.s32.totalorder %s23, 6
      %s33 = sphi 0, %s35
      %s36 = sphi 0, %s33
      %s37 = sphi 0, %s36
      %s53 = sphi 0, %s37
      %s57 = sphi 0, %s57
      %s59 = sphi 0, %s57
      %s60 = sphi 0, %s59
      %s74 = sphi 0, %s60
      %s78 = sphi 0, %s78
      %s80 = sphi 0, %s78
      %s81 = sphi 0, %s80
      %s95 = sphi 0, %s81
      %s99 = sphi 0, %s99
      %s101 = sphi 0, %s99
      %s102 = sphi 0, %s101
      %s116 = sphi 0, %s102
      %s120 = sphi 0, %s120
      %s122 = sphi 0, %s120
      %s123 = sphi 0, %s122
      %s137 = sphi 0, %s123
      %s141 = sphi 0, %s141
      %s143 = sphi 0, %s141
      %s144 = sphi 0, %s143
      %s158 = sphi 0, %s144
      %s162 = sphi 0, %s162
      %s164 = sphi 0, %s162
      %s165 = sphi 0, %s164
      %s179 = sphi 0, %s165
      %s183 = sphi 0, %s183
      %s185 = sphi 0, %s183
      %s186 = sphi 0, %s185
      %s200 = sphi 0, %s186
      %s204 = sphi 0, %s204
      %s206 = sphi 0, %s204
      %s207 = sphi 0, %s206
      %s221 = sphi 0, %s207
      %s227 = sphi 0, %s229
      %s230 = sphi 0, %s227
      %s231 = sphi 0, %s230
      %s247 = sphi 0, %s231
    $region4: #{tpu_custom_call.1} parent=1 // loop_header_branch
      %26 = sbr.rel (%p24) target = $region8
    $region5: #{tpu_custom_call.1} parent=1 // loop_body
      %s28 = ssub.s32 %s23, 1
      %s29 = ssub.s32 %s23, 2
      %s30 = sadd.s32 %s23, 1
      %s31 = ssub.s32 %s23, %s30
      %p32 = scmp.eq.s32.totalorder %s31, 0
      %s34 = sadd.s32 %s33, 1
      %s35 = scalar_select %p32, %s33, %s34
      %p38 = pneg %p32
      %p39 = scmp.eq.s32.totalorder %s23, 3
      %p40 = por %p38, %p39
      %p41 = scmp.ne.s32.totalorder %s33, %s36
      %p42 = scmp.eq.s32.totalorder %s23, 0
      %p43 = por %p41, %p42
      %p44 = scmp.ne.s32.totalorder %s33, %s36
      %p45 = scmp.eq.s32.totalorder %s28, 3
      %p46 = por %p44, %p45
      %p47 = scmp.ne.s32.totalorder %s36, %s37
      %p48 = scmp.eq.s32.totalorder %s28, 0
      %p49 = por %p47, %p48
      %p50 = scmp.ne.s32.totalorder %s36, %s37
      %p51 = scmp.eq.s32.totalorder %s29, 3
      %p52 = por %p50, %p51
      %p54 = scmp.ne.s32.totalorder %s37, %s53
      %p55 = scmp.eq.s32.totalorder %s29, 0
      %p56 = por %p54, %p55
      %s58 = sadd.s32 %s57, 1
      %p61 = scmp.eq.s32.totalorder %s23, 3
      %p62 = scmp.ne.s32.totalorder %s57, %s59
      %p63 = scmp.eq.s32.totalorder %s23, 0
      %p64 = por %p62, %p63
      %p65 = scmp.ne.s32.totalorder %s57, %s59
      %p66 = scmp.eq.s32.totalorder %s28, 3
      %p67 = por %p65, %p66
      %p68 = scmp.ne.s32.totalorder %s59, %s60
      %p69 = scmp.eq.s32.totalorder %s28, 0
      %p70 = por %p68, %p69
      %p71 = scmp.ne.s32.totalorder %s59, %s60
      %p72 = scmp.eq.s32.totalorder %s29, 3
      %p73 = por %p71, %p72
      %p75 = scmp.ne.s32.totalorder %s60, %s74
      %p76 = scmp.eq.s32.totalorder %s29, 0
      %p77 = por %p75, %p76
      %s79 = sadd.s32 %s78, 1
      %p82 = scmp.eq.s32.totalorder %s23, 3
      %p83 = scmp.ne.s32.totalorder %s78, %s80
      %p84 = scmp.eq.s32.totalorder %s23, 0
      %p85 = por %p83, %p84
      %p86 = scmp.ne.s32.totalorder %s78, %s80
      %p87 = scmp.eq.s32.totalorder %s28, 3
      %p88 = por %p86, %p87
      %p89 = scmp.ne.s32.totalorder %s80, %s81
      %p90 = scmp.eq.s32.totalorder %s28, 0
      %p91 = por %p89, %p90
      %p92 = scmp.ne.s32.totalorder %s80, %s81
      %p93 = scmp.eq.s32.totalorder %s29, 3
      %p94 = por %p92, %p93
      %p96 = scmp.ne.s32.totalorder %s81, %s95
      %p97 = scmp.eq.s32.totalorder %s29, 0
      %p98 = por %p96, %p97
      %s100 = sadd.s32 %s99, 1
      %p103 = scmp.eq.s32.totalorder %s23, 3
      %p104 = scmp.ne.s32.totalorder %s99, %s101
      %p105 = scmp.eq.s32.totalorder %s23, 0
      %p106 = por %p104, %p105
      %p107 = scmp.ne.s32.totalorder %s99, %s101
      %p108 = scmp.eq.s32.totalorder %s28, 3
      %p109 = por %p107, %p108
      %p110 = scmp.ne.s32.totalorder %s101, %s102
      %p111 = scmp.eq.s32.totalorder %s28, 0
      %p112 = por %p110, %p111
      %p113 = scmp.ne.s32.totalorder %s101, %s102
      %p114 = scmp.eq.s32.totalorder %s29, 3
      %p115 = por %p113, %p114
      %p117 = scmp.ne.s32.totalorder %s102, %s116
      %p118 = scmp.eq.s32.totalorder %s29, 0
      %p119 = por %p117, %p118
      %s121 = sadd.s32 %s120, 1
      %p124 = scmp.eq.s32.totalorder %s23, 3
      %p125 = scmp.ne.s32.totalorder %s120, %s122
      %p126 = scmp.eq.s32.totalorder %s23, 0
      %p127 = por %p125, %p126
      %p128 = scmp.ne.s32.totalorder %s120, %s122
      %p129 = scmp.eq.s32.totalorder %s28, 3
      %p130 = por %p128, %p129
      %p131 = scmp.ne.s32.totalorder %s122, %s123
      %p132 = scmp.eq.s32.totalorder %s28, 0
      %p133 = por %p131, %p132
      %p134 = scmp.ne.s32.totalorder %s122, %s123
      %p135 = scmp.eq.s32.totalorder %s29, 3
      %p136 = por %p134, %p135
      %p138 = scmp.ne.s32.totalorder %s123, %s137
      %p139 = scmp.eq.s32.totalorder %s29, 0
      %p140 = por %p138, %p139
      %s142 = sadd.s32 %s141, 1
      %p145 = scmp.eq.s32.totalorder %s23, 3
      %p146 = scmp.ne.s32.totalorder %s141, %s143
      %p147 = scmp.eq.s32.totalorder %s23, 0
      %p148 = por %p146, %p147
      %p149 = scmp.ne.s32.totalorder %s141, %s143
      %p150 = scmp.eq.s32.totalorder %s28, 3
      %p151 = por %p149, %p150
      %p152 = scmp.ne.s32.totalorder %s143, %s144
      %p153 = scmp.eq.s32.totalorder %s28, 0
      %p154 = por %p152, %p153
      %p155 = scmp.ne.s32.totalorder %s143, %s144
      %p156 = scmp.eq.s32.totalorder %s29, 3
      %p157 = por %p155, %p156
      %p159 = scmp.ne.s32.totalorder %s144, %s158
      %p160 = scmp.eq.s32.totalorder %s29, 0
      %p161 = por %p159, %p160
      %s163 = sadd.s32 %s162, 1
      %p166 = scmp.eq.s32.totalorder %s23, 3
      %p167 = scmp.ne.s32.totalorder %s162, %s164
      %p168 = scmp.eq.s32.totalorder %s23, 0
      %p169 = por %p167, %p168
      %p170 = scmp.ne.s32.totalorder %s162, %s164
      %p171 = scmp.eq.s32.totalorder %s28, 3
      %p172 = por %p170, %p171
      %p173 = scmp.ne.s32.totalorder %s164, %s165
      %p174 = scmp.eq.s32.totalorder %s28, 0
      %p175 = por %p173, %p174
      %p176 = scmp.ne.s32.totalorder %s164, %s165
      %p177 = scmp.eq.s32.totalorder %s29, 3
      %p178 = por %p176, %p177
      %p180 = scmp.ne.s32.totalorder %s165, %s179
      %p181 = scmp.eq.s32.totalorder %s29, 0
      %p182 = por %p180, %p181
      %s184 = sadd.s32 %s183, 1
      %p187 = scmp.eq.s32.totalorder %s23, 3
      %p188 = scmp.ne.s32.totalorder %s183, %s185
      %p189 = scmp.eq.s32.totalorder %s23, 0
      %p190 = por %p188, %p189
      %p191 = scmp.ne.s32.totalorder %s183, %s185
      %p192 = scmp.eq.s32.totalorder %s28, 3
      %p193 = por %p191, %p192
      %p194 = scmp.ne.s32.totalorder %s185, %s186
      %p195 = scmp.eq.s32.totalorder %s28, 0
      %p196 = por %p194, %p195
      %p197 = scmp.ne.s32.totalorder %s185, %s186
      %p198 = scmp.eq.s32.totalorder %s29, 3
      %p199 = por %p197, %p198
      %p201 = scmp.ne.s32.totalorder %s186, %s200
      %p202 = scmp.eq.s32.totalorder %s29, 0
      %p203 = por %p201, %p202
      %s205 = sadd.s32 %s204, 1
      %p208 = scmp.eq.s32.totalorder %s23, 3
      %p209 = scmp.ne.s32.totalorder %s204, %s206
      %p210 = scmp.eq.s32.totalorder %s23, 0
      %p211 = por %p209, %p210
      %p212 = scmp.ne.s32.totalorder %s204, %s206
      %p213 = scmp.eq.s32.totalorder %s28, 3
      %p214 = por %p212, %p213
      %p215 = scmp.ne.s32.totalorder %s206, %s207
      %p216 = scmp.eq.s32.totalorder %s28, 0
      %p217 = por %p215, %p216
      %p218 = scmp.ne.s32.totalorder %s206, %s207
      %p219 = scmp.eq.s32.totalorder %s29, 3
      %p220 = por %p218, %p219
      %p222 = scmp.ne.s32.totalorder %s207, %s221
      %p223 = scmp.eq.s32.totalorder %s29, 0
      %p224 = por %p222, %p223
      %s225 = ssub.s32 %s23, %s30
      %p226 = scmp.eq.s32.totalorder %s225, 0
      %s228 = sadd.s32 %s227, 1
      %s229 = scalar_select %p226, %s227, %s228
      %p232 = pneg %p226
      %p233 = scmp.eq.s32.totalorder %s23, 3
      %p234 = por %p232, %p233
      %p235 = scmp.ne.s32.totalorder %s227, %s230
      %p236 = scmp.eq.s32.totalorder %s23, 0
      %p237 = por %p235, %p236
      %p238 = scmp.ne.s32.totalorder %s227, %s230
      %p239 = scmp.eq.s32.totalorder %s28, 3
      %p240 = por %p238, %p239
      %p241 = scmp.ne.s32.totalorder %s230, %s231
      %p242 = scmp.eq.s32.totalorder %s28, 0
      %p243 = por %p241, %p242
      %p244 = scmp.ne.s32.totalorder %s230, %s231
      %p245 = scmp.eq.s32.totalorder %s29, 3
      %p246 = por %p244, %p245
      %p248 = scmp.ne.s32.totalorder %s231, %s247
      %p249 = scmp.eq.s32.totalorder %s29, 0
      %p250 = por %p248, %p249
      %p251 = scmp.le.s32.totalorder 1, %s23
      %p252 = scmp.lt.s32.totalorder %s23, 5
      %p253 = pnand %p251, %p252
      %p254 = pneg %p253
      // Predicated region
      $region9: #{tpu_custom_call.1} parent=5 // pred_check
        _
      $region10: #{tpu_custom_call.1} parent=5 // pred_check_branch
        %256 = sbr.rel (%p253) target = $region12
      $region11: #{tpu_custom_call.1} parent=5 // pred_region
        %s257 = ssub.s32 %s23, 1
        // Predicated region
        $region13: #{tpu_custom_call.1} parent=11 // pred_check
          %p258 = pneg %p70
        $region14: #{tpu_custom_call.1} parent=11 // pred_check_branch
          %260 = sbr.rel (%p258) target = $region16
        $region15: #{tpu_custom_call.1} parent=11 // pred_region
          _
        $region16: #{tpu_custom_call.1} parent=11 // pred_fallthru
          _
        // Predicated region
        $region17: #{tpu_custom_call.1} parent=11 // pred_check
          %p261 = pneg %p91
        $region18: #{tpu_custom_call.1} parent=11 // pred_check_branch
          %263 = sbr.rel (%p261) target = $region20
        $region19: #{tpu_custom_call.1} parent=11 // pred_region
          _
        $region20: #{tpu_custom_call.1} parent=11 // pred_fallthru
          _
        // Predicated region
        $region21: #{tpu_custom_call.1} parent=11 // pred_check
          %p264 = pneg %p112
        $region22: #{tpu_custom_call.1} parent=11 // pred_check_branch
          %266 = sbr.rel (%p264) target = $region24
        $region23: #{tpu_custom_call.1} parent=11 // pred_region
          _
        $region24: #{tpu_custom_call.1} parent=11 // pred_fallthru
          _
        // Predicated region
        $region25: #{tpu_custom_call.1} parent=11 // pred_check
          %p267 = pneg %p133
        $region26: #{tpu_custom_call.1} parent=11 // pred_check_branch
          %269 = sbr.rel (%p267) target = $region28
        $region27: #{tpu_custom_call.1} parent=11 // pred_region
          _
        $region28: #{tpu_custom_call.1} parent=11 // pred_fallthru
          _
        // Predicated region
        $region29: #{tpu_custom_call.1} parent=11 // pred_check
          %p270 = pneg %p154
        $region30: #{tpu_custom_call.1} parent=11 // pred_check_branch
          %272 = sbr.rel (%p270) target = $region32
        $region31: #{tpu_custom_call.1} parent=11 // pred_region
          _
        $region32: #{tpu_custom_call.1} parent=11 // pred_fallthru
          _
        // Predicated region
        $region33: #{tpu_custom_call.1} parent=11 // pred_check
          %p273 = pneg %p175
        $region34: #{tpu_custom_call.1} parent=11 // pred_check_branch
          %275 = sbr.rel (%p273) target = $region36
        $region35: #{tpu_custom_call.1} parent=11 // pred_region
          _
        $region36: #{tpu_custom_call.1} parent=11 // pred_fallthru
          _
        // Predicated region
        $region37: #{tpu_custom_call.1} parent=11 // pred_check
          %p276 = pneg %p196
        $region38: #{tpu_custom_call.1} parent=11 // pred_check_branch
          %278 = sbr.rel (%p276) target = $region40
        $region39: #{tpu_custom_call.1} parent=11 // pred_region
          _
        $region40: #{tpu_custom_call.1} parent=11 // pred_fallthru
          _
        // Predicated region
        $region41: #{tpu_custom_call.1} parent=11 // pred_check
          %p279 = pneg %p217
        $region42: #{tpu_custom_call.1} parent=11 // pred_check_branch
          %281 = sbr.rel (%p279) target = $region44
        $region43: #{tpu_custom_call.1} parent=11 // pred_region
          _
        $region44: #{tpu_custom_call.1} parent=11 // pred_fallthru
          _
      $region12: #{tpu_custom_call.1} parent=5 // pred_fallthru
        _
      %p282 = scmp.lt.s32.totalorder %s23, 4
      // Predicated region
      $region45: #{tpu_custom_call.1} parent=5 // pred_check
        %p283 = pneg %p282
      $region46: #{tpu_custom_call.1} parent=5 // pred_check_branch
        %285 = sbr.rel (%p283) target = $region48
      $region47: #{tpu_custom_call.1} parent=5 // pred_region
        // Predicated region
        $region49: #{tpu_custom_call.1} parent=47 // pred_check
          %p286 = pneg %p43
        $region50: #{tpu_custom_call.1} parent=47 // pred_check_branch
          %288 = sbr.rel (%p286) target = $region52
        $region51: #{tpu_custom_call.1} parent=47 // pred_region
          %s289 = sand.u32 %s33, 1
          %s290 = scalar_lea.sflag [#allocation4], %s289
          %s291 = sand.u32 %s33, 1
          %s292 = smul.addr %s291, 256
          %s293 = scalar_lea.vmem [#allocation3], %s292
          %s294 = smul.u32 16, %s23
          %296 = vsyncadd %s290, 0
          %s297 = smul.addr %s294, 2
          %s298 = smul.addr %s297, 8
          %s299 = scalar_lea.hbm %s0, %s298
          %s300 = sshll.u32 %s299, 4
          %s301 = int_to_ptr.hbm [resolvable:$true] %s300
          %s302 = sshll.u32 %s293, 4
          %s303 = int_to_ptr.vmem [resolvable:$true] %s302
          %308 = dma.hbm_to_vmem [thread:$0]  %s301, 4096, %s303, %s290, 256, 256, 16
        $region52: #{tpu_custom_call.1} parent=47 // pred_fallthru
          _
      $region48: #{tpu_custom_call.1} parent=5 // pred_fallthru
        _
      %p309 = scmp.le.s32.totalorder 1, %s23
      %p310 = scmp.lt.s32.totalorder %s23, 5
      %p311 = pnand %p309, %p310
      %p312 = pneg %p311
      // Predicated region
      $region53: #{tpu_custom_call.1} parent=5 // pred_check
        _
      $region54: #{tpu_custom_call.1} parent=5 // pred_check_branch
        %314 = sbr.rel (%p311) target = $region56
      $region55: #{tpu_custom_call.1} parent=5 // pred_region
        %s315 = ssub.s32 %s23, 1
        %s316 = sand.u32 %s36, 1
        %s317 = scalar_lea.sflag [#allocation4], %s316
        %s318 = sand.u32 %s36, 1
        %s319 = smul.addr %s318, 256
        %s320 = scalar_lea.vmem [#allocation3], %s319
        // Predicated region
        $region57: #{tpu_custom_call.1} parent=55 // pred_check
          %p321 = pneg %p49
        $region58: #{tpu_custom_call.1} parent=55 // pred_check_branch
          %323 = sbr.rel (%p321) target = $region60
        $region59: #{tpu_custom_call.1} parent=55 // pred_region
          %325 = dma.done %s317, 4096
        $region60: #{tpu_custom_call.1} parent=55 // pred_fallthru
          _
        %s326 = sand.u32 %s36, 1
        %s327 = scalar_lea.sflag [#allocation4], %s326
        %s328 = sand.u32 %s36, 1
        %s329 = smul.addr %s328, 256
        %s330 = scalar_lea.vmem [#allocation3], %s329
        %p331 = pneg %p49
        %p332 = pneg %p46
        %p333 = pneg %p70
        %p334 = pneg %p67
        %p335 = pneg %p91
        %p336 = pneg %p88
        %p337 = pneg %p112
        %p338 = pneg %p109
        %p339 = pneg %p133
        %p340 = pneg %p130
        %p341 = pneg %p154
        %p342 = pneg %p151
        %p343 = pneg %p175
        %p344 = pneg %p172
        %p345 = pneg %p196
        %p346 = pneg %p193
        %p347 = pneg %p217
        %p348 = pneg %p214
        %p349 = pneg %p243
        %p350 = pneg %p240
        %s351 = sand.u32 %s230, 1
        %s352 = scalar_lea.sflag [#allocation5], %s351
        %s353 = sand.u32 %s230, 1
        %s354 = scalar_lea.vmem [#allocation6], %s353
        %s355 = smul.u32 16, %s28
        %v356 = vld [vmem:[%s320] sm:$0xff]
        %v357 = vld [vmem:[%s320 + $0x8] sm:$0xff]
        %v358 = vld [vmem:[%s320 + $0x10] sm:$0xff]
        %v359 = vld [vmem:[%s320 + $0x18] sm:$0xff]
        %v360 = vld [vmem:[%s320 + $0x20] sm:$0xff]
        %v361 = vld [vmem:[%s320 + $0x28] sm:$0xff]
        %v362 = vld [vmem:[%s320 + $0x30] sm:$0xff]
        %v363 = vld [vmem:[%s320 + $0x38] sm:$0xff]
        %v364 = vld [vmem:[%s320 + $0x40] sm:$0xff]
        %v365 = vld [vmem:[%s320 + $0x48] sm:$0xff]
        %v366 = vld [vmem:[%s320 + $0x50] sm:$0xff]
        %v367 = vld [vmem:[%s320 + $0x58] sm:$0xff]
        %v368 = vld [vmem:[%s320 + $0x60] sm:$0xff]
        %v369 = vld [vmem:[%s320 + $0x68] sm:$0xff]
        %v370 = vld [vmem:[%s320 + $0x70] sm:$0xff]
        %v371 = vld [vmem:[%s320 + $0x78] sm:$0xff]
        %v372 = vld [vmem:[%s320 + $0x80] sm:$0xff]
        %v373 = vld [vmem:[%s320 + $0x88] sm:$0xff]
        %v374 = vld [vmem:[%s320 + $0x90] sm:$0xff]
        %v375 = vld [vmem:[%s320 + $0x98] sm:$0xff]
        %v376 = vld [vmem:[%s320 + $0xa0] sm:$0xff]
        %v377 = vld [vmem:[%s320 + $0xa8] sm:$0xff]
        %v378 = vld [vmem:[%s320 + $0xb0] sm:$0xff]
        %v379 = vld [vmem:[%s320 + $0xb8] sm:$0xff]
        %v380 = vld [vmem:[%s320 + $0xc0] sm:$0xff]
        %v381 = vld [vmem:[%s320 + $0xc8] sm:$0xff]
        %v382 = vld [vmem:[%s320 + $0xd0] sm:$0xff]
        %v383 = vld [vmem:[%s320 + $0xd8] sm:$0xff]
        %v384 = vld [vmem:[%s320 + $0xe0] sm:$0xff]
        %v385 = vld [vmem:[%s320 + $0xe8] sm:$0xff]
        %v386 = vld [vmem:[%s320 + $0xf0] sm:$0xff]
        %v387 = vld [vmem:[%s320 + $0xf8] sm:$0xff]
        %v388 = vld [vmem:[%s1] sm:$0xff]
        %v389 = vld [vmem:[%s1 + $0x8] sm:$0xff]
        %v390 = vld [vmem:[%s1 + $0x10] sm:$0xff]
        %v391 = vld [vmem:[%s1 + $0x18] sm:$0xff]
        %v392 = vld [vmem:[%s1 + $0x20] sm:$0xff]
        %v393 = vld [vmem:[%s1 + $0x28] sm:$0xff]
        %v394 = vld [vmem:[%s1 + $0x30] sm:$0xff]
        %v395 = vld [vmem:[%s1 + $0x38] sm:$0xff]
        %v396 = vld [vmem:[%s1 + $0x40] sm:$0xff]
        %v397 = vld [vmem:[%s1 + $0x48] sm:$0xff]
        %v398 = vld [vmem:[%s1 + $0x50] sm:$0xff]
        %v399 = vld [vmem:[%s1 + $0x58] sm:$0xff]
        %v400 = vld [vmem:[%s1 + $0x60] sm:$0xff]
        %v401 = vld [vmem:[%s1 + $0x68] sm:$0xff]
        %v402 = vld [vmem:[%s1 + $0x70] sm:$0xff]
        %v403 = vld [vmem:[%s1 + $0x78] sm:$0xff]
        %v404 = vld [vmem:[%s1 + $0x80] sm:$0xff]
        %v405 = vld [vmem:[%s1 + $0x88] sm:$0xff]
        %v406 = vld [vmem:[%s1 + $0x90] sm:$0xff]
        %v407 = vld [vmem:[%s1 + $0x98] sm:$0xff]
        %v408 = vld [vmem:[%s1 + $0xa0] sm:$0xff]
        %v409 = vld [vmem:[%s1 + $0xa8] sm:$0xff]
        %v410 = vld [vmem:[%s1 + $0xb0] sm:$0xff]
        %v411 = vld [vmem:[%s1 + $0xb8] sm:$0xff]
        %v412 = vld [vmem:[%s1 + $0xc0] sm:$0xff]
        %v413 = vld [vmem:[%s1 + $0xc8] sm:$0xff]
        %v414 = vld [vmem:[%s1 + $0xd0] sm:$0xff]
        %v415 = vld [vmem:[%s1 + $0xd8] sm:$0xff]
        %v416 = vld [vmem:[%s1 + $0xe0] sm:$0xff]
        %v417 = vld [vmem:[%s1 + $0xe8] sm:$0xff]
        %v418 = vld [vmem:[%s1 + $0xf0] sm:$0xff]
        %v419 = vld [vmem:[%s1 + $0xf8] sm:$0xff]
        %v420 = vld [vmem:[%s2] sm:$0x1]
        %v422 = vperm.slane %v420, 0
        %424 = vmatpush.msra.mxu0 %v403
        %425 = vmatpush.msra.mxu0 %v402
        %426 = vmatpush.msra.mxu0 %v401
        %427 = vmatpush.msra.mxu0 %v400
        %428 = vmatpush.msra.mxu0 %v399
        %429 = vmatpush.msra.mxu0 %v398
        %430 = vmatpush.msra.mxu0 %v397
        %431 = vmatpush.msra.mxu0 %v396
        %432 = vmatpush.msra.mxu0 %v395
        %433 = vmatpush.msra.mxu0 %v394
        %434 = vmatpush.msra.mxu0 %v393
        %435 = vmatpush.msra.mxu0 %v392
        %436 = vmatpush.msra.mxu0 %v391
        %437 = vmatpush.msra.mxu0 %v390
        %438 = vmatpush.msra.mxu0 %v389
        %439 = vmatpush.msra.mxu0 %v388
        %440 = vmatmul.f32.gmra.mxu0 %v356
        %v441 = vpop.f32.mrf.mxu0
        %v442 = vadd.f32 %v422, %v441
        %443 = vmatmul.f32.gmra.mxu0 %v358
        %v444 = vpop.f32.mrf.mxu0
        %v445 = vadd.f32 %v422, %v444
        %446 = vmatmul.f32.gmra.mxu0 %v360
        %v447 = vpop.f32.mrf.mxu0
        %v448 = vadd.f32 %v422, %v447
        %449 = vmatmul.f32.gmra.mxu0 %v362
        %v450 = vpop.f32.mrf.mxu0
        %v451 = vadd.f32 %v422, %v450
        %452 = vmatmul.f32.gmra.mxu0 %v364
        %v453 = vpop.f32.mrf.mxu0
        %v454 = vadd.f32 %v422, %v453
        %455 = vmatmul.f32.gmra.mxu0 %v366
        %v456 = vpop.f32.mrf.mxu0
        %v457 = vadd.f32 %v422, %v456
        %458 = vmatmul.f32.gmra.mxu0 %v368
        %v459 = vpop.f32.mrf.mxu0
        %v460 = vadd.f32 %v422, %v459
        %461 = vmatmul.f32.gmra.mxu0 %v370
        %v462 = vpop.f32.mrf.mxu0
        %v463 = vadd.f32 %v422, %v462
        %464 = vmatmul.f32.gmra.mxu0 %v372
        %v465 = vpop.f32.mrf.mxu0
        %v466 = vadd.f32 %v422, %v465
        %467 = vmatmul.f32.gmra.mxu0 %v374
        %v468 = vpop.f32.mrf.mxu0
        %v469 = vadd.f32 %v422, %v468
        %470 = vmatmul.f32.gmra.mxu0 %v376
        %v471 = vpop.f32.mrf.mxu0
        %v472 = vadd.f32 %v422, %v471
        %473 = vmatmul.f32.gmra.mxu0 %v378
        %v474 = vpop.f32.mrf.mxu0
        %v475 = vadd.f32 %v422, %v474
        %476 = vmatmul.f32.gmra.mxu0 %v380
        %v477 = vpop.f32.mrf.mxu0
        %v478 = vadd.f32 %v422, %v477
        %479 = vmatmul.f32.gmra.mxu0 %v382
        %v480 = vpop.f32.mrf.mxu0
        %v481 = vadd.f32 %v422, %v480
        %482 = vmatmul.f32.gmra.mxu0 %v384
        %v483 = vpop.f32.mrf.mxu0
        %v484 = vadd.f32 %v422, %v483
        %485 = vmatmul.f32.gmra.mxu0 %v386
        %v486 = vpop.f32.mrf.mxu0
        %v487 = vadd.f32 %v422, %v486
        %488 = vdwg.mxu0
        %489 = vmatpush.msra.mxu0 %v419
        %490 = vmatpush.msra.mxu0 %v418
        %491 = vmatpush.msra.mxu0 %v417
        %492 = vmatpush.msra.mxu0 %v416
        %493 = vmatpush.msra.mxu0 %v415
        %494 = vmatpush.msra.mxu0 %v414
        %495 = vmatpush.msra.mxu0 %v413
        %496 = vmatpush.msra.mxu0 %v412
        %497 = vmatpush.msra.mxu0 %v411
        %498 = vmatpush.msra.mxu0 %v410
        %499 = vmatpush.msra.mxu0 %v409
        %500 = vmatpush.msra.mxu0 %v408
        %501 = vmatpush.msra.mxu0 %v407
        %502 = vmatpush.msra.mxu0 %v406
        %503 = vmatpush.msra.mxu0 %v405
        %504 = vmatpush.msra.mxu0 %v404
        %505 = vmatmul.f32.gmra.mxu0 %v357
        %v506 = vpop.f32.mrf.mxu0
        %v507 = vadd.f32 %v442, %v506
        %508 = vmatmul.f32.gmra.mxu0 %v359
        %v509 = vpop.f32.mrf.mxu0
        %v510 = vadd.f32 %v445, %v509
        %511 = vmatmul.f32.gmra.mxu0 %v361
        %v512 = vpop.f32.mrf.mxu0
        %v513 = vadd.f32 %v448, %v512
        %514 = vmatmul.f32.gmra.mxu0 %v363
        %v515 = vpop.f32.mrf.mxu0
        %v516 = vadd.f32 %v451, %v515
        %517 = vmatmul.f32.gmra.mxu0 %v365
        %v518 = vpop.f32.mrf.mxu0
        %v519 = vadd.f32 %v454, %v518
        %520 = vmatmul.f32.gmra.mxu0 %v367
        %v521 = vpop.f32.mrf.mxu0
        %v522 = vadd.f32 %v457, %v521
        %523 = vmatmul.f32.gmra.mxu0 %v369
        %v524 = vpop.f32.mrf.mxu0
        %v525 = vadd.f32 %v460, %v524
        %526 = vmatmul.f32.gmra.mxu0 %v371
        %v527 = vpop.f32.mrf.mxu0
        %v528 = vadd.f32 %v463, %v527
        %529 = vmatmul.f32.gmra.mxu0 %v373
        %v530 = vpop.f32.mrf.mxu0
        %v531 = vadd.f32 %v466, %v530
        %532 = vmatmul.f32.gmra.mxu0 %v375
        %v533 = vpop.f32.mrf.mxu0
        %v534 = vadd.f32 %v469, %v533
        %535 = vmatmul.f32.gmra.mxu0 %v377
        %v536 = vpop.f32.mrf.mxu0
        %v537 = vadd.f32 %v472, %v536
        %538 = vmatmul.f32.gmra.mxu0 %v379
        %v539 = vpop.f32.mrf.mxu0
        %v540 = vadd.f32 %v475, %v539
        %541 = vmatmul.f32.gmra.mxu0 %v381
        %v542 = vpop.f32.mrf.mxu0
        %v543 = vadd.f32 %v478, %v542
        %544 = vmatmul.f32.gmra.mxu0 %v383
        %v545 = vpop.f32.mrf.mxu0
        %v546 = vadd.f32 %v481, %v545
        %547 = vmatmul.f32.gmra.mxu0 %v385
        %v548 = vpop.f32.mrf.mxu0
        %v549 = vadd.f32 %v484, %v548
        %550 = vmatmul.f32.gmra.mxu0 %v387
        %v551 = vpop.f32.mrf.mxu0
        %v552 = vadd.f32 %v487, %v551
        %553 = vdwg.mxu0
        %vm554 = vcmp.gt.f32.partialorder %v507, 0.0
        %vm555 = vcmp.gt.f32.partialorder %v510, 0.0
        %vm556 = vcmp.gt.f32.partialorder %v513, 0.0
        %vm557 = vcmp.gt.f32.partialorder %v516, 0.0
        %vm558 = vcmp.gt.f32.partialorder %v519, 0.0
        %vm559 = vcmp.gt.f32.partialorder %v522, 0.0
        %vm560 = vcmp.gt.f32.partialorder %v525, 0.0
        %vm561 = vcmp.gt.f32.partialorder %v528, 0.0
        %vm562 = vcmp.gt.f32.partialorder %v531, 0.0
        %vm563 = vcmp.gt.f32.partialorder %v534, 0.0
        %vm564 = vcmp.gt.f32.partialorder %v537, 0.0
        %vm565 = vcmp.gt.f32.partialorder %v540, 0.0
        %vm566 = vcmp.gt.f32.partialorder %v543, 0.0
        %vm567 = vcmp.gt.f32.partialorder %v546, 0.0
        %vm568 = vcmp.gt.f32.partialorder %v549, 0.0
        %vm569 = vcmp.gt.f32.partialorder %v552, 0.0
        %v570 = vmul.f32 %v507, 0.01
        %v571 = vmul.f32 %v510, 0.01
        %v572 = vmul.f32 %v513, 0.01
        %v573 = vmul.f32 %v516, 0.01
        %v574 = vmul.f32 %v519, 0.01
        %v575 = vmul.f32 %v522, 0.01
        %v576 = vmul.f32 %v525, 0.01
        %v577 = vmul.f32 %v528, 0.01
        %v578 = vmul.f32 %v531, 0.01
        %v579 = vmul.f32 %v534, 0.01
        %v580 = vmul.f32 %v537, 0.01
        %v581 = vmul.f32 %v540, 0.01
        %v582 = vmul.f32 %v543, 0.01
        %v583 = vmul.f32 %v546, 0.01
        %v584 = vmul.f32 %v549, 0.01
        %v585 = vmul.f32 %v552, 0.01
        %v586 = vsel %vm554, %v507, %v570
        %v587 = vsel %vm555, %v510, %v571
        %v588 = vsel %vm556, %v513, %v572
        %v589 = vsel %vm557, %v516, %v573
        %v590 = vsel %vm558, %v519, %v574
        %v591 = vsel %vm559, %v522, %v575
        %v592 = vsel %vm560, %v525, %v576
        %v593 = vsel %vm561, %v528, %v577
        %v594 = vsel %vm562, %v531, %v578
        %v595 = vsel %vm563, %v534, %v579
        %v596 = vsel %vm564, %v537, %v580
        %v597 = vsel %vm565, %v540, %v581
        %v598 = vsel %vm566, %v543, %v582
        %v599 = vsel %vm567, %v546, %v583
        %v600 = vsel %vm568, %v549, %v584
        %v601 = vsel %vm569, %v552, %v585
        %v602 = vld [vmem:[%s3] sm:$0xff]
        %v603 = vld [vmem:[%s3 + $0x8] sm:$0xff]
        %v604 = vld [vmem:[%s3 + $0x10] sm:$0xff]
        %v605 = vld [vmem:[%s3 + $0x18] sm:$0xff]
        %v606 = vld [vmem:[%s3 + $0x20] sm:$0xff]
        %v607 = vld [vmem:[%s3 + $0x28] sm:$0xff]
        %v608 = vld [vmem:[%s3 + $0x30] sm:$0xff]
        %v609 = vld [vmem:[%s3 + $0x38] sm:$0xff]
        %v610 = vld [vmem:[%s4] sm:$0x1]
        %v612 = vperm.slane %v610, 0
        %vm614 = vcmask 523264
        %v616 = vsel %vm614, %v586, 0
        %v619 = vsel %vm614, %v587, 0
        %v622 = vsel %vm614, %v588, 0
        %v625 = vsel %vm614, %v589, 0
        %v628 = vsel %vm614, %v590, 0
        %v631 = vsel %vm614, %v591, 0
        %v634 = vsel %vm614, %v592, 0
        %v637 = vsel %vm614, %v593, 0
        %v640 = vsel %vm614, %v594, 0
        %v643 = vsel %vm614, %v595, 0
        %v646 = vsel %vm614, %v596, 0
        %v649 = vsel %vm614, %v597, 0
        %v652 = vsel %vm614, %v598, 0
        %v655 = vsel %vm614, %v599, 0
        %v658 = vsel %vm614, %v600, 0
        %v661 = vsel %vm614, %v601, 0
        %663 = vmatpush.msra.mxu0 0.0
        %664 = vmatpush.msra.mxu0 0.0
        %665 = vmatpush.msra.mxu0 0.0
        %666 = vmatpush.msra.mxu0 0.0
        %667 = vmatpush.msra.mxu0 0.0
        %668 = vmatpush.msra.mxu0 0.0
        %669 = vmatpush.msra.mxu0 0.0
        %670 = vmatpush.msra.mxu0 0.0
        %671 = vmatpush.msra.mxu0 %v609
        %672 = vmatpush.msra.mxu0 %v608
        %673 = vmatpush.msra.mxu0 %v607
        %674 = vmatpush.msra.mxu0 %v606
        %675 = vmatpush.msra.mxu0 %v605
        %676 = vmatpush.msra.mxu0 %v604
        %677 = vmatpush.msra.mxu0 %v603
        %678 = vmatpush.msra.mxu0 %v602
        %679 = vmatmul.f32.gmra.mxu0 %v616
        %v680 = vpop.f32.mrf.mxu0
        %v681 = vadd.f32 %v612, %v680
        %682 = vmatmul.f32.gmra.mxu0 %v619
        %v683 = vpop.f32.mrf.mxu0
        %v684 = vadd.f32 %v612, %v683
        %685 = vmatmul.f32.gmra.mxu0 %v622
        %v686 = vpop.f32.mrf.mxu0
        %v687 = vadd.f32 %v612, %v686
        %688 = vmatmul.f32.gmra.mxu0 %v625
        %v689 = vpop.f32.mrf.mxu0
        %v690 = vadd.f32 %v612, %v689
        %691 = vmatmul.f32.gmra.mxu0 %v628
        %v692 = vpop.f32.mrf.mxu0
        %v693 = vadd.f32 %v612, %v692
        %694 = vmatmul.f32.gmra.mxu0 %v631
        %v695 = vpop.f32.mrf.mxu0
        %v696 = vadd.f32 %v612, %v695
        %697 = vmatmul.f32.gmra.mxu0 %v634
        %v698 = vpop.f32.mrf.mxu0
        %v699 = vadd.f32 %v612, %v698
        %700 = vmatmul.f32.gmra.mxu0 %v637
        %v701 = vpop.f32.mrf.mxu0
        %v702 = vadd.f32 %v612, %v701
        %703 = vmatmul.f32.gmra.mxu0 %v640
        %v704 = vpop.f32.mrf.mxu0
        %v705 = vadd.f32 %v612, %v704
        %706 = vmatmul.f32.gmra.mxu0 %v643
        %v707 = vpop.f32.mrf.mxu0
        %v708 = vadd.f32 %v612, %v707
        %709 = vmatmul.f32.gmra.mxu0 %v646
        %v710 = vpop.f32.mrf.mxu0
        %v711 = vadd.f32 %v612, %v710
        %712 = vmatmul.f32.gmra.mxu0 %v649
        %v713 = vpop.f32.mrf.mxu0
        %v714 = vadd.f32 %v612, %v713
        %715 = vmatmul.f32.gmra.mxu0 %v652
        %v716 = vpop.f32.mrf.mxu0
        %v717 = vadd.f32 %v612, %v716
        %718 = vmatmul.f32.gmra.mxu0 %v655
        %v719 = vpop.f32.mrf.mxu0
        %v720 = vadd.f32 %v612, %v719
        %721 = vmatmul.f32.gmra.mxu0 %v658
        %v722 = vpop.f32.mrf.mxu0
        %v723 = vadd.f32 %v612, %v722
        %724 = vmatmul.f32.gmra.mxu0 %v661
        %v725 = vpop.f32.mrf.mxu0
        %v726 = vadd.f32 %v612, %v725
        %727 = vdwg.mxu0
        %vm728 = vcmp.gt.f32.partialorder %v681, 0.0
        %vm729 = vcmp.gt.f32.partialorder %v684, 0.0
        %vm730 = vcmp.gt.f32.partialorder %v687, 0.0
        %vm731 = vcmp.gt.f32.partialorder %v690, 0.0
        %vm732 = vcmp.gt.f32.partialorder %v693, 0.0
        %vm733 = vcmp.gt.f32.partialorder %v696, 0.0
        %vm734 = vcmp.gt.f32.partialorder %v699, 0.0
        %vm735 = vcmp.gt.f32.partialorder %v702, 0.0
        %vm736 = vcmp.gt.f32.partialorder %v705, 0.0
        %vm737 = vcmp.gt.f32.partialorder %v708, 0.0
        %vm738 = vcmp.gt.f32.partialorder %v711, 0.0
        %vm739 = vcmp.gt.f32.partialorder %v714, 0.0
        %vm740 = vcmp.gt.f32.partialorder %v717, 0.0
        %vm741 = vcmp.gt.f32.partialorder %v720, 0.0
        %vm742 = vcmp.gt.f32.partialorder %v723, 0.0
        %vm743 = vcmp.gt.f32.partialorder %v726, 0.0
        %v744 = vmul.f32 %v681, 0.01
        %v745 = vmul.f32 %v684, 0.01
        %v746 = vmul.f32 %v687, 0.01
        %v747 = vmul.f32 %v690, 0.01
        %v748 = vmul.f32 %v693, 0.01
        %v749 = vmul.f32 %v696, 0.01
        %v750 = vmul.f32 %v699, 0.01
        %v751 = vmul.f32 %v702, 0.01
        %v752 = vmul.f32 %v705, 0.01
        %v753 = vmul.f32 %v708, 0.01
        %v754 = vmul.f32 %v711, 0.01
        %v755 = vmul.f32 %v714, 0.01
        %v756 = vmul.f32 %v717, 0.01
        %v757 = vmul.f32 %v720, 0.01
        %v758 = vmul.f32 %v723, 0.01
        %v759 = vmul.f32 %v726, 0.01
        %v760 = vsel %vm728, %v681, %v744
        %v761 = vsel %vm729, %v684, %v745
        %v762 = vsel %vm730, %v687, %v746
        %v763 = vsel %vm731, %v690, %v747
        %v764 = vsel %vm732, %v693, %v748
        %v765 = vsel %vm733, %v696, %v749
        %v766 = vsel %vm734, %v699, %v750
        %v767 = vsel %vm735, %v702, %v751
        %v768 = vsel %vm736, %v705, %v752
        %v769 = vsel %vm737, %v708, %v753
        %v770 = vsel %vm738, %v711, %v754
        %v771 = vsel %vm739, %v714, %v755
        %v772 = vsel %vm740, %v717, %v756
        %v773 = vsel %vm741, %v720, %v757
        %v774 = vsel %vm742, %v723, %v758
        %v775 = vsel %vm743, %v726, %v759
        %v776 = vld [vmem:[%s5] sm:$0xff]
        %v777 = vld [vmem:[%s5 + $0x8] sm:$0xff]
        %v778 = vld [vmem:[%s5 + $0x10] sm:$0xff]
        %v779 = vld [vmem:[%s5 + $0x18] sm:$0xff]
        %v780 = vld [vmem:[%s6] sm:$0x1]
        %v782 = vperm.slane %v780, 0
        %vm784 = vcmask 261120
        %v786 = vsel %vm784, %v760, 0
        %v789 = vsel %vm784, %v761, 0
        %v792 = vsel %vm784, %v762, 0
        %v795 = vsel %vm784, %v763, 0
        %v798 = vsel %vm784, %v764, 0
        %v801 = vsel %vm784, %v765, 0
        %v804 = vsel %vm784, %v766, 0
        %v807 = vsel %vm784, %v767, 0
        %v810 = vsel %vm784, %v768, 0
        %v813 = vsel %vm784, %v769, 0
        %v816 = vsel %vm784, %v770, 0
        %v819 = vsel %vm784, %v771, 0
        %v822 = vsel %vm784, %v772, 0
        %v825 = vsel %vm784, %v773, 0
        %v828 = vsel %vm784, %v774, 0
        %v831 = vsel %vm784, %v775, 0
        %833 = vmatpush.msra.mxu0 0.0
        %834 = vmatpush.msra.mxu0 0.0
        %835 = vmatpush.msra.mxu0 0.0
        %836 = vmatpush.msra.mxu0 0.0
        %837 = vmatpush.msra.mxu0 0.0
        %838 = vmatpush.msra.mxu0 0.0
        %839 = vmatpush.msra.mxu0 0.0
        %840 = vmatpush.msra.mxu0 0.0
        %841 = vmatpush.msra.mxu0 0.0
        %842 = vmatpush.msra.mxu0 0.0
        %843 = vmatpush.msra.mxu0 0.0
        %844 = vmatpush.msra.mxu0 0.0
        %845 = vmatpush.msra.mxu0 %v779
        %846 = vmatpush.msra.mxu0 %v778
        %847 = vmatpush.msra.mxu0 %v777
        %848 = vmatpush.msra.mxu0 %v776
        %849 = vmatmul.f32.gmra.mxu0 %v786
        %v850 = vpop.f32.mrf.mxu0
        %v851 = vadd.f32 %v782, %v850
        %852 = vmatmul.f32.gmra.mxu0 %v789
        %v853 = vpop.f32.mrf.mxu0
        %v854 = vadd.f32 %v782, %v853
        %855 = vmatmul.f32.gmra.mxu0 %v792
        %v856 = vpop.f32.mrf.mxu0
        %v857 = vadd.f32 %v782, %v856
        %858 = vmatmul.f32.gmra.mxu0 %v795
        %v859 = vpop.f32.mrf.mxu0
        %v860 = vadd.f32 %v782, %v859
        %861 = vmatmul.f32.gmra.mxu0 %v798
        %v862 = vpop.f32.mrf.mxu0
        %v863 = vadd.f32 %v782, %v862
        %864 = vmatmul.f32.gmra.mxu0 %v801
        %v865 = vpop.f32.mrf.mxu0
        %v866 = vadd.f32 %v782, %v865
        %867 = vmatmul.f32.gmra.mxu0 %v804
        %v868 = vpop.f32.mrf.mxu0
        %v869 = vadd.f32 %v782, %v868
        %870 = vmatmul.f32.gmra.mxu0 %v807
        %v871 = vpop.f32.mrf.mxu0
        %v872 = vadd.f32 %v782, %v871
        %873 = vmatmul.f32.gmra.mxu0 %v810
        %v874 = vpop.f32.mrf.mxu0
        %v875 = vadd.f32 %v782, %v874
        %876 = vmatmul.f32.gmra.mxu0 %v813
        %v877 = vpop.f32.mrf.mxu0
        %v878 = vadd.f32 %v782, %v877
        %879 = vmatmul.f32.gmra.mxu0 %v816
        %v880 = vpop.f32.mrf.mxu0
        %v881 = vadd.f32 %v782, %v880
        %882 = vmatmul.f32.gmra.mxu0 %v819
        %v883 = vpop.f32.mrf.mxu0
        %v884 = vadd.f32 %v782, %v883
        %885 = vmatmul.f32.gmra.mxu0 %v822
        %v886 = vpop.f32.mrf.mxu0
        %v887 = vadd.f32 %v782, %v886
        %888 = vmatmul.f32.gmra.mxu0 %v825
        %v889 = vpop.f32.mrf.mxu0
        %v890 = vadd.f32 %v782, %v889
        %891 = vmatmul.f32.gmra.mxu0 %v828
        %v892 = vpop.f32.mrf.mxu0
        %v893 = vadd.f32 %v782, %v892
        %894 = vmatmul.f32.gmra.mxu0 %v831
        %v895 = vpop.f32.mrf.mxu0
        %v896 = vadd.f32 %v782, %v895
        %897 = vdwg.mxu0
        %vm898 = vcmp.gt.f32.partialorder %v851, 0.0
        %vm899 = vcmp.gt.f32.partialorder %v854, 0.0
        %vm900 = vcmp.gt.f32.partialorder %v857, 0.0
        %vm901 = vcmp.gt.f32.partialorder %v860, 0.0
        %vm902 = vcmp.gt.f32.partialorder %v863, 0.0
        %vm903 = vcmp.gt.f32.partialorder %v866, 0.0
        %vm904 = vcmp.gt.f32.partialorder %v869, 0.0
        %vm905 = vcmp.gt.f32.partialorder %v872, 0.0
        %vm906 = vcmp.gt.f32.partialorder %v875, 0.0
        %vm907 = vcmp.gt.f32.partialorder %v878, 0.0
        %vm908 = vcmp.gt.f32.partialorder %v881, 0.0
        %vm909 = vcmp.gt.f32.partialorder %v884, 0.0
        %vm910 = vcmp.gt.f32.partialorder %v887, 0.0
        %vm911 = vcmp.gt.f32.partialorder %v890, 0.0
        %vm912 = vcmp.gt.f32.partialorder %v893, 0.0
        %vm913 = vcmp.gt.f32.partialorder %v896, 0.0
        %v914 = vmul.f32 %v851, 0.01
        %v915 = vmul.f32 %v854, 0.01
        %v916 = vmul.f32 %v857, 0.01
        %v917 = vmul.f32 %v860, 0.01
        %v918 = vmul.f32 %v863, 0.01
        %v919 = vmul.f32 %v866, 0.01
        %v920 = vmul.f32 %v869, 0.01
        %v921 = vmul.f32 %v872, 0.01
        %v922 = vmul.f32 %v875, 0.01
        %v923 = vmul.f32 %v878, 0.01
        %v924 = vmul.f32 %v881, 0.01
        %v925 = vmul.f32 %v884, 0.01
        %v926 = vmul.f32 %v887, 0.01
        %v927 = vmul.f32 %v890, 0.01
        %v928 = vmul.f32 %v893, 0.01
        %v929 = vmul.f32 %v896, 0.01
        %v930 = vsel %vm898, %v851, %v914
        %v931 = vsel %vm899, %v854, %v915
        %v932 = vsel %vm900, %v857, %v916
        %v933 = vsel %vm901, %v860, %v917
        %v934 = vsel %vm902, %v863, %v918
        %v935 = vsel %vm903, %v866, %v919
        %v936 = vsel %vm904, %v869, %v920
        %v937 = vsel %vm905, %v872, %v921
        %v938 = vsel %vm906, %v875, %v922
        %v939 = vsel %vm907, %v878, %v923
        %v940 = vsel %vm908, %v881, %v924
        %v941 = vsel %vm909, %v884, %v925
        %v942 = vsel %vm910, %v887, %v926
        %v943 = vsel %vm911, %v890, %v927
        %v944 = vsel %vm912, %v893, %v928
        %v945 = vsel %vm913, %v896, %v929
        %v946 = vld [vmem:[%s7] sm:$0x1]
        %v947 = vld [vmem:[#allocation2] sm:$0x1]
        %949 = vset.pattern.permute.xlu0 0
        %950 = vperm.xlu0 %949, %v947
        %v951 = vpop.permute.xlu0 %950
        %v953 = vperm.slane %v951, 0
        %vm954 = vcmask 130048
        %v956 = vsel %vm954, %v946, 0
        %v959 = vsel %vm954, %v930, 0
        %v962 = vsel %vm954, %v931, 0
        %v965 = vsel %vm954, %v932, 0
        %v968 = vsel %vm954, %v933, 0
        %v971 = vsel %vm954, %v934, 0
        %v974 = vsel %vm954, %v935, 0
        %v977 = vsel %vm954, %v936, 0
        %v980 = vsel %vm954, %v937, 0
        %v983 = vsel %vm954, %v938, 0
        %v986 = vsel %vm954, %v939, 0
        %v989 = vsel %vm954, %v940, 0
        %v992 = vsel %vm954, %v941, 0
        %v995 = vsel %vm954, %v942, 0
        %v998 = vsel %vm954, %v943, 0
        %v1001 = vsel %vm954, %v944, 0
        %v1004 = vsel %vm954, %v945, 0
        %1006 = vmatpush.xpose.msra.mxu0 %v1004
        %1007 = vmatpush.xpose.msra.mxu0 %v1001
        %1008 = vmatpush.xpose.msra.mxu0 %v998
        %1009 = vmatpush.xpose.msra.mxu0 %v995
        %1010 = vmatpush.xpose.msra.mxu0 %v992
        %1011 = vmatpush.xpose.msra.mxu0 %v989
        %1012 = vmatpush.xpose.msra.mxu0 %v986
        %1013 = vmatpush.xpose.msra.mxu0 %v983
        %1014 = vmatpush.xpose.msra.mxu0 %v980
        %1015 = vmatpush.xpose.msra.mxu0 %v977
        %1016 = vmatpush.xpose.msra.mxu0 %v974
        %1017 = vmatpush.xpose.msra.mxu0 %v971
        %1018 = vmatpush.xpose.msra.mxu0 %v968
        %1019 = vmatpush.xpose.msra.mxu0 %v965
        %1020 = vmatpush.xpose.msra.mxu0 %v962
        %1021 = vmatpush.xpose.msra.mxu0 %v959
        %1022 = vmatmul.f32.gmra.mxu0 %v956
        %v1023 = vpop.f32.mrf.mxu0
        %v1024 = vadd.f32 %v953, %v1023
        %1025 = vdwg.mxu0
        %v1026 = vmul.f32 %v1024, 0.5
        %v1027 = vtanh.pop %v1026
        %v1028 = vmul.f32 %v1027, 0.5
        %v1029 = vadd.f32 %v1028, 0.5
        %1030 = vst [vmem:[%s354] sm:$0x1] %v1029
        %s1031 = sand.u32 %s230, 1
        %s1032 = scalar_lea.sflag [#allocation5], %s1031
        %s1033 = sand.u32 %s230, 1
        %s1034 = scalar_lea.vmem [#allocation6], %s1033
        // Predicated region
        $region61: #{tpu_custom_call.1} parent=55 // pred_check
          %p1035 = pneg %p240
        $region62: #{tpu_custom_call.1} parent=55 // pred_check_branch
          %1037 = sbr.rel (%p1035) target = $region64
        $region63: #{tpu_custom_call.1} parent=55 // pred_region
          %1039 = vsyncadd %s1032, 0
          %s1040 = scalar_lea.hbm %s9, %s28
          %s1042 = sshll.u32 %s1034, 4
          %s1043 = int_to_ptr.vmem [resolvable:$true] %s1042
          %s1044 = sshll.u32 %s1040, 4
          %s1045 = int_to_ptr.hbm [resolvable:$true] %s1044
          %1047 = dma.vmem_to_hbm [thread:$0]  %s1043, 16, %s1045, %s1032
        $region64: #{tpu_custom_call.1} parent=55 // pred_fallthru
          _
      $region56: #{tpu_custom_call.1} parent=5 // pred_fallthru
        _
      %p1048 = scmp.le.s32.totalorder 2, %s23
      // Predicated region
      $region65: #{tpu_custom_call.1} parent=5 // pred_check
        %p1049 = pneg %p1048
      $region66: #{tpu_custom_call.1} parent=5 // pred_check_branch
        %1051 = sbr.rel (%p1049) target = $region68
      $region67: #{tpu_custom_call.1} parent=5 // pred_region
        %s1052 = ssub.s32 %s23, 2
        // Predicated region
        $region69: #{tpu_custom_call.1} parent=67 // pred_check
          %p1053 = pneg %p246
        $region70: #{tpu_custom_call.1} parent=67 // pred_check_branch
          %1055 = sbr.rel (%p1053) target = $region72
        $region71: #{tpu_custom_call.1} parent=67 // pred_region
          %s1056 = sand.u32 %s231, 1
          %s1057 = scalar_lea.sflag [#allocation5], %s1056
          %s1058 = sand.u32 %s231, 1
          %s1059 = scalar_lea.vmem [#allocation6], %s1058
          %1061 = dma.done %s1057, 16
        $region72: #{tpu_custom_call.1} parent=67 // pred_fallthru
          _
      $region68: #{tpu_custom_call.1} parent=5 // pred_fallthru
        _
    $region6: #{tpu_custom_call.1} parent=1 // loop_footer
      %s27 = sadd.s32 1, %s23
    $region7: #{tpu_custom_call.1} parent=1 // loop_footer_branch
      %22 = sbr.rel target = $region3
    $region8: #{tpu_custom_call.1} parent=1 // loop_exit
      _
    %1062 = vsyncpa [#allocation4], 1
    %s1063 = scalar_lea.sflag [#allocation4], 1
    %1064 = vsyncpa %s1063, 1
    %1065 = vsyncpa [#allocation5], 1
    %s1066 = scalar_lea.sflag [#allocation5], 1
    %1067 = vsyncpa %s1066, 1

</llo_original>
